<compile_context>
chip_gen: v7x
topology: tpu7x:2x2x1
jax: 0.10.0
libtpu: 0.0.40
codegen_flags: <defaults>
</compile_context>

<pallas_src>
import jax
import jax.numpy as jnp
from jax.experimental import pallas as pl
from jax.experimental.pallas import tpu as pltpu

_VMEM_LIMIT = 48 * 1024 * 1024   # < v7x 64 MiB physical; plenty of headroom on v5e/v6e
_LN_EPS = 1e-5                   # PyTorch nn.LayerNorm default


def _cparams(*semantics):
    return pltpu.CompilerParams(dimension_semantics=tuple(semantics),
                                vmem_limit_bytes=_VMEM_LIMIT)


def _row_tile(m, target=256):
    """Largest sublane (2nd-to-last) tile: multiple of 8 dividing m, else full m."""
    if m <= target:
        return m
    t = (target // 8) * 8
    while t >= 8:
        if m % t == 0:
            return t
        t -= 8
    return m


def _lane_tile(n, target=512):
    """Largest lane (last-dim) tile: multiple of 128 dividing n, else full n."""
    if n <= target:
        return n
    t = (target // 128) * 128
    while t >= 128:
        if n % t == 0:
            return t
        t -= 128
    return n


# --------------------------------------------------------------------------
# K-tiled matmul with fused epilogue (bias / gelu / output-LN / residual add)
# --------------------------------------------------------------------------

def _make_matmul_kernel(has_bias, has_residual, activation, has_out_ln, eps):
    def kernel(*refs):
        it = iter(refs)
        x_ref = next(it)
        w_ref = next(it)
        bias_ref = next(it) if has_bias else None
        res_ref = next(it) if has_residual else None
        g_ref = next(it) if has_out_ln else None
        b2_ref = next(it) if has_out_ln else None
        o_ref = next(it)
        acc_ref = next(it)

        k = pl.program_id(2)

        @pl.when(k == 0)
        def _():
            acc_ref[...] = jnp.zeros_like(acc_ref)

        acc_ref[...] += jnp.dot(x_ref[...], w_ref[...],
                                preferred_element_type=jnp.float32)

        @pl.when(k == pl.num_programs(2) - 1)
        def _():
            y = acc_ref[...]
            if has_bias:
                y = y + bias_ref[...].astype(jnp.float32)
            if activation == "gelu":
                y = jax.nn.gelu(y, approximate=False)   # exact erf GELU (PyTorch default)
            if has_out_ln:
                mean = jnp.mean(y, axis=-1, keepdims=True)
                var = jnp.mean(jnp.square(y - mean), axis=-1, keepdims=True)
                y = (y - mean) * jax.lax.rsqrt(var + eps)
                y = y * g_ref[...].astype(jnp.float32) + b2_ref[...].astype(jnp.float32)
            if has_residual:
                y = y + res_ref[...].astype(jnp.float32)
            o_ref[...] = y.astype(o_ref.dtype)
    return kernel


def pallas_matmul(x, w, bias=None, residual=None, activation=None, out_ln=None,
                  out_dtype=None, eps=_LN_EPS):
    """y = epilogue(x @ w); epilogue = (+bias)(gelu)(LN)(+residual). x:(M,K) w:(K,N)."""
    M, K = x.shape
    Kw, N = w.shape
    assert Kw == K
    tm = _row_tile(M)
    tn = N if out_ln is not None else _lane_tile(N)   # output LN needs the full row
    tk = _lane_tile(K)
    grid = (M // tm, N // tn, K // tk)

    in_specs = [pl.BlockSpec((tm, tk), lambda i, j, k: (i, k)),
                pl.BlockSpec((tk, tn), lambda i, j, k: (k, j))]
    args = [x, w]
    if bias is not None:
        in_specs.append(pl.BlockSpec((1, tn), lambda i, j, k: (0, j)))
        args.append(bias.reshape(1, N))
    if residual is not None:
        in_specs.append(pl.BlockSpec((tm, tn), lambda i, j, k: (i, j)))
        args.append(residual)
    if out_ln is not None:
        g, b2 = out_ln
        in_specs += [pl.BlockSpec((1, tn), lambda i, j, k: (0, j)),
                     pl.BlockSpec((1, tn), lambda i, j, k: (0, j))]
        args += [g.reshape(1, N), b2.reshape(1, N)]

    if out_dtype is None:
        out_dtype = x.dtype
    kernel = _make_matmul_kernel(bias is not None, residual is not None,
                                 activation, out_ln is not None, eps)
    return pl.pallas_call(
        kernel,
        grid=grid,
        out_shape=jax.ShapeDtypeStruct((M, N), out_dtype),
        in_specs=in_specs,
        out_specs=pl.BlockSpec((tm, tn), lambda i, j, k: (i, j)),
        scratch_shapes=[pltpu.VMEM((tm, tn), jnp.float32)],
        compiler_params=_cparams("parallel", "parallel", "arbitrary"),
    )(*args)


# --------------------------------------------------------------------------
# Fused LayerNorm -> matmul (+bias, +gelu)    [LN2->fc1, PatchMerging norm->red]
# --------------------------------------------------------------------------

def _make_ln_matmul_kernel(has_bias, activation, eps):
    def kernel(*refs):
        x_ref, g_ref, b_ref, w_ref = refs[:4]
        nxt = 4
        bias_ref = None
        if has_bias:
            bias_ref = refs[nxt]
            nxt += 1
        o_ref = refs[nxt]

        x = x_ref[...].astype(jnp.float32)
        mean = jnp.mean(x, axis=-1, keepdims=True)
        var = jnp.mean(jnp.square(x - mean), axis=-1, keepdims=True)
        xn = (x - mean) * jax.lax.rsqrt(var + eps)
        xn = xn * g_ref[...].astype(jnp.float32) + b_ref[...].astype(jnp.float32)
        y = jnp.dot(xn.astype(w_ref.dtype), w_ref[...],
                    preferred_element_type=jnp.float32)
        if has_bias:
            y = y + bias_ref[...].astype(jnp.float32)
        if activation == "gelu":
            y = jax.nn.gelu(y, approximate=False)
        o_ref[...] = y.astype(o_ref.dtype)
    return kernel


def pallas_ln_matmul(x, gamma, beta, w, bias=None, activation=None,
                     out_dtype=None, eps=_LN_EPS):
    M, K = x.shape
    Kw, N = w.shape
    assert Kw == K
    tm = _row_tile(M)
    tn = _lane_tile(N)
    grid = (M // tm, N // tn)

    in_specs = [pl.BlockSpec((tm, K), lambda i, j: (i, 0)),
                pl.BlockSpec((1, K), lambda i, j: (0, 0)),
                pl.BlockSpec((1, K), lambda i, j: (0, 0)),
                pl.BlockSpec((K, tn), lambda i, j: (0, j))]
    args = [x, gamma.reshape(1, K), beta.reshape(1, K), w]
    if bias is not None:
        in_specs.append(pl.BlockSpec((1, tn), lambda i, j: (0, j)))
        args.append(bias.reshape(1, N))

    if out_dtype is None:
        out_dtype = x.dtype
    return pl.pallas_call(
        _make_ln_matmul_kernel(bias is not None, activation, eps),
        grid=grid,
        out_shape=jax.ShapeDtypeStruct((M, N), out_dtype),
        in_specs=in_specs,
        out_specs=pl.BlockSpec((tm, tn), lambda i, j: (i, j)),
        compiler_params=_cparams("parallel", "parallel"),
    )(*args)


# --------------------------------------------------------------------------
# Fused LayerNorm -> QKV projection (3 outputs; to_qkv has no bias)
# --------------------------------------------------------------------------

def _make_ln_qkv_kernel(eps):
    def kernel(x_ref, g_ref, b_ref, wq_ref, wk_ref, wv_ref, q_ref, k_ref, v_ref):
        x = x_ref[...].astype(jnp.float32)
        mean = jnp.mean(x, axis=-1, keepdims=True)
        var = jnp.mean(jnp.square(x - mean), axis=-1, keepdims=True)
        xn = (x - mean) * jax.lax.rsqrt(var + eps)
        xn = (xn * g_ref[...].astype(jnp.float32)
              + b_ref[...].astype(jnp.float32)).astype(wq_ref.dtype)
        q_ref[...] = jnp.dot(xn, wq_ref[...],
                             preferred_element_type=jnp.float32).astype(q_ref.dtype)
        k_ref[...] = jnp.dot(xn, wk_ref[...],
                             preferred_element_type=jnp.float32).astype(k_ref.dtype)
        v_ref[...] = jnp.dot(xn, wv_ref[...],
                             preferred_element_type=jnp.float32).astype(v_ref.dtype)
    return kernel


def pallas_ln_qkv(x, gamma, beta, wq, wk, wv, eps=_LN_EPS):
    M, C = x.shape
    tm = _row_tile(M)
    grid = (M // tm,)
    x_spec = pl.BlockSpec((tm, C), lambda i: (i, 0))
    vec_spec = pl.BlockSpec((1, C), lambda i: (0, 0))
    w_spec = pl.BlockSpec((C, C), lambda i: (0, 0))
    out_spec = pl.BlockSpec((tm, C), lambda i: (i, 0))
    out_sds = jax.ShapeDtypeStruct((M, C), x.dtype)
    return pl.pallas_call(
        _make_ln_qkv_kernel(eps),
        grid=grid,
        out_shape=(out_sds, out_sds, out_sds),
        in_specs=[x_spec, vec_spec, vec_spec, w_spec, w_spec, w_spec],
        out_specs=(out_spec, out_spec, out_spec),
        compiler_params=_cparams("parallel"),
    )(x, gamma.reshape(1, C), beta.reshape(1, C), wq, wk, wv)


# --------------------------------------------------------------------------
# Flash-style multi-head attention over lane-dense (B, N, C) slabs
# --------------------------------------------------------------------------

def _make_attention_kernel(heads, dh, scale):
    def kernel(q_ref, k_ref, v_ref, o_ref, m_s, l_s, acc_s):
        kv = pl.program_id(2)

        @pl.when(kv == 0)
        def _():
            m_s[...] = jnp.full_like(m_s, -jnp.inf)
            l_s[...] = jnp.zeros_like(l_s)
            acc_s[...] = jnp.zeros_like(acc_s)

        q = q_ref[0]      # (tq, C)  bf16 operands -> MXU full rate, f32 accumulate
        k = k_ref[0]      # (tkv, C)
        v = v_ref[0]      # (tkv, C)

        for h in range(heads):                       # static unroll over heads
            qh = q[:, h * dh:(h + 1) * dh]
            kh = k[:, h * dh:(h + 1) * dh]
            vh = v[:, h * dh:(h + 1) * dh]
            s = jax.lax.dot_general(qh, kh, (((1,), (1,)), ((), ())),
                                    preferred_element_type=jnp.float32) * scale
            m_prev = m_s[h]                                          # (tq, 1)
            m_new = jnp.maximum(m_prev, jnp.max(s, axis=-1, keepdims=True))
            alpha = jnp.exp(m_prev - m_new)
            p = jnp.exp(s - m_new)
            l_s[h] = alpha * l_s[h] + jnp.sum(p, axis=-1, keepdims=True)
            acc_s[h] = alpha * acc_s[h] + jnp.dot(p.astype(vh.dtype), vh,
                                                  preferred_element_type=jnp.float32)
            m_s[h] = m_new

        @pl.when(kv == pl.num_programs(2) - 1)
        def _():
            outs = []
            for h in range(heads):
                inv = pl.reciprocal(l_s[h], approx=True)   # EUP slot, not VALU divide
                outs.append(acc_s[h] * inv)
            o_ref[0] = jnp.concatenate(outs, axis=-1).astype(o_ref.dtype)
    return kernel


def pallas_attention(q, k, v, heads):
    """q, k, v: (B, N, C) -> softmax(q k^T * dh^-0.5) v, multi-head, (B, N, C)."""
    B, N, C = q.shape
    dh = C // heads
    scale = dh ** -0.5
    tq = _row_tile(N, 256)
    tkv = _row_tile(N, 512)
    grid = (B, N // tq, N // tkv)
    q_spec = pl.BlockSpec((1, tq, C), lambda b, qi, ki: (b, qi, 0))
    kv_spec = pl.BlockSpec((1, tkv, C), lambda b, qi, ki: (b, ki, 0))
    return pl.pallas_call(
        _make_attention_kernel(heads, dh, scale),
        grid=grid,
        out_shape=jax.ShapeDtypeStruct((B, N, C), q.dtype),
        in_specs=[q_spec, kv_spec, kv_spec],
        out_specs=q_spec,
        scratch_shapes=[pltpu.VMEM((heads, tq, 1), jnp.float32),
                        pltpu.VMEM((heads, tq, 1), jnp.float32),
                        pltpu.VMEM((heads, tq, dh), jnp.float32)],
        compiler_params=_cparams("parallel", "parallel", "arbitrary"),
    )(q, k, v)


# --------------------------------------------------------------------------
# Standalone row-tiled LayerNorm (final norm)
# --------------------------------------------------------------------------

def _make_layernorm_kernel(eps):
    def kernel(x_ref, g_ref, b_ref, o_ref):
        x = x_ref[...].astype(jnp.float32)
        mean = jnp.mean(x, axis=-1, keepdims=True)
        var = jnp.mean(jnp.square(x - mean), axis=-1, keepdims=True)
        xn = (x - mean) * jax.lax.rsqrt(var + eps)
        o_ref[...] = (xn * g_ref[...].astype(jnp.float32)
                      + b_ref[...].astype(jnp.float32)).astype(o_ref.dtype)
    return kernel


def pallas_layernorm(x, gamma, beta, eps=_LN_EPS):
    M, C = x.shape
    tm = _row_tile(M, 512)
    return pl.pallas_call(
        _make_layernorm_kernel(eps),
        grid=(M // tm,),
        out_shape=jax.ShapeDtypeStruct((M, C), x.dtype),
        in_specs=[pl.BlockSpec((tm, C), lambda i: (i, 0)),
                  pl.BlockSpec((1, C), lambda i: (0, 0)),
                  pl.BlockSpec((1, C), lambda i: (0, 0))],
        out_specs=pl.BlockSpec((tm, C), lambda i: (i, 0)),
        compiler_params=_cparams("parallel"),
    )(x, gamma.reshape(1, C), beta.reshape(1, C))


# --------------------------------------------------------------------------
# Model glue
# --------------------------------------------------------------------------

def patch_embed(x_nchw, p, patch_size, embed_dim):
    # Conv2d(kernel=stride=patch) == im2col + matmul; patch_norm fused into epilogue.
    B, C, H, W = x_nchw.shape
    ph = pw = patch_size
    Ho, Wo = H // ph, W // pw
    # TODO(synk): the im2col gather stays in XLA; it could be folded into the
    # projection's BlockSpec index_map to save one full input pass.
    x = x_nchw.reshape(B, C, Ho, ph, Wo, pw).transpose(0, 2, 4, 1, 3, 5)
    x = x.reshape(B * Ho * Wo, C * ph * pw)
    y = pallas_matmul(x, p["w_proj"], bias=p["b_proj"],
                      out_ln=(p["norm_g"], p["norm_b"]))
    return y.reshape(B, Ho * Wo, embed_dim)


def vit_block(x, p, heads):
    B, N, C = x.shape
    x2 = x.reshape(B * N, C)

    # attention branch: LN1 fused into QKV; shortcut fused into out-projection
    q, k, v = pallas_ln_qkv(x2, p["ln1_g"], p["ln1_b"],
                            p["attn"]["w_q"], p["attn"]["w_k"], p["attn"]["w_v"])
    o = pallas_attention(q.reshape(B, N, C), k.reshape(B, N, C),
                         v.reshape(B, N, C), heads)
    x2 = pallas_matmul(o.reshape(B * N, C), p["attn"]["w_out"],
                       bias=p["attn"]["b_out"], residual=x2)

    # MLP branch: LN2 fused into fc1(+gelu); shortcut fused into fc2
    h = pallas_ln_matmul(x2, p["ln2_g"], p["ln2_b"],
                         p["mlp"]["w_fc1"], bias=p["mlp"]["b_fc1"], activation="gelu")
    x2 = pallas_matmul(h, p["mlp"]["w_fc2"], bias=p["mlp"]["b_fc2"], residual=x2)
    return x2.reshape(B, N, C)


def patch_merging(x, p, H, W):
    B, L, C = x.shape
    x = x.reshape(B, H, W, C)
    x0 = x[:, 0::2, 0::2, :]
    x1 = x[:, 1::2, 0::2, :]
    x2 = x[:, 0::2, 1::2, :]
    x3 = x[:, 1::2, 1::2, :]
    xm = jnp.concatenate([x0, x1, x2, x3], axis=-1)
    xm = xm.reshape(B * (H // 2) * (W // 2), 4 * C)
    y = pallas_ln_matmul(xm, p["norm_g"], p["norm_b"], p["w_red"])   # reduction: no bias
    return y.reshape(B, (H // 2) * (W // 2), 2 * C)


def vit_forward(params, x_nchw, cfg):
    # TODO(synk): Dropout / DropPath / torch.utils.checkpoint are training-only; eval identities here.
    x_nchw = x_nchw.astype(cfg["dtype"])
    x = patch_embed(x_nchw, params["patch_embed"], cfg["patch_size"], cfg["embed_dim"])
    H = W = cfg["img_size"] // cfg["patch_size"]
    for i_layer, layer_p in enumerate(params["layers"]):
        heads = cfg["num_heads"][i_layer]
        for blk_p in layer_p["blocks"]:
            x = vit_block(x, blk_p, heads)
        if layer_p["downsample"] is not None:
            x = patch_merging(x, layer_p["downsample"], H, W)
            H //= 2
            W //= 2
    B, L, C = x.shape
    x = pallas_layernorm(x.reshape(B * L, C), params["norm_g"], params["norm_b"])
    return x.reshape(B, L, C)


# --------------------------------------------------------------------------
# Deterministic parameter init (trunc_normal ~ N(0, 0.02) surrogate; LN = (1, 0))
# --------------------------------------------------------------------------

def init_params(key, cfg):
    dt = cfg["dtype"]

    def nrm(k, shape, std=0.02):
        return (std * jax.random.normal(k, shape, jnp.float32)).astype(dt)

    keys = iter(jax.random.split(key, 512))
    E, C_in, psz = cfg["embed_dim"], cfg["in_chans"], cfg["patch_size"]
    num_layers = len(cfg["depths"])

    params = {
        "patch_embed": {
            "w_proj": nrm(next(keys), (C_in * psz * psz, E)),
            "b_proj": jnp.zeros((E,), dt),
            "norm_g": jnp.ones((E,), dt),
            "norm_b": jnp.zeros((E,), dt),
        },
        "layers": [],
    }
    for i in range(num_layers):
        dim = E * 2 ** i
        hidden = int(dim * cfg["mlp_ratio"])
        blocks = []
        for _ in range(cfg["depths"][i]):
            blocks.append({
                "ln1_g": jnp.ones((dim,), dt), "ln1_b": jnp.zeros((dim,), dt),
                "ln2_g": jnp.ones((dim,), dt), "ln2_b": jnp.zeros((dim,), dt),
                "attn": {
                    # to_qkv has no bias; stored pre-split into q/k/v weights.
                    "w_q": nrm(next(keys), (dim, dim)),
                    "w_k": nrm(next(keys), (dim, dim)),
                    "w_v": nrm(next(keys), (dim, dim)),
                    "w_out": nrm(next(keys), (dim, dim)),
                    "b_out": jnp.zeros((dim,), dt),
                },
                "mlp": {
                    "w_fc1": nrm(next(keys), (dim, hidden)),
                    "b_fc1": jnp.zeros((hidden,), dt),
                    "w_fc2": nrm(next(keys), (hidden, dim)),
                    "b_fc2": jnp.zeros((dim,), dt),
                },
            })
        downsample = None
        if i < num_layers - 1:
            downsample = {
                "norm_g": jnp.ones((4 * dim,), dt),
                "norm_b": jnp.zeros((4 * dim,), dt),
                "w_red": nrm(next(keys), (4 * dim, 2 * dim)),
            }
        params["layers"].append({"blocks": blocks, "downsample": downsample})

    num_features = E * 2 ** (num_layers - 1)
    params["norm_g"] = jnp.ones((num_features,), dt)
    params["norm_b"] = jnp.zeros((num_features,), dt)
    return params


# --------------------------------------------------------------------------

if __name__ == "__main__":
    cfg = dict(img_size=16, patch_size=4, in_chans=4, embed_dim=32,
               depths=[1, 1], num_heads=[2, 4], mlp_ratio=4.0,
               dtype=jnp.bfloat16)

    key = jax.random.PRNGKey(0)
    k_params, k_x = jax.random.split(key)
    params = init_params(k_params, cfg)

    x = jax.random.normal(k_x, (2, cfg["in_chans"], cfg["img_size"], cfg["img_size"]),
                          jnp.float32)

    out = vit_forward(params, x, cfg)
    jax.block_until_ready(out)

    num_features = cfg["embed_dim"] * 2 ** (len(cfg["depths"]) - 1)
    final_tokens = (cfg["img_size"] // cfg["patch_size"]) ** 2 // 4 ** (len(cfg["depths"]) - 1)
    assert out.shape == (2, final_tokens, num_features), out.shape
    assert bool(jnp.all(jnp.isfinite(out.astype(jnp.float32))))
    print("KERNEL_OK")
</pallas_src>

<mosaic_0001>
module attributes {stable_mosaic.version = 11 : i64} {
  func.func @kernel(%arg0: i32, %arg1: i32, %arg2: i32, %arg3: memref<32x64xbf16, #tpu.memory_space<vmem>>, %arg4: memref<64x32xbf16, #tpu.memory_space<vmem>>, %arg5: memref<1x32xbf16, #tpu.memory_space<vmem>>, %arg6: memref<1x32xbf16, #tpu.memory_space<vmem>>, %arg7: memref<1x32xbf16, #tpu.memory_space<vmem>>, %arg8: memref<32x32xbf16, #tpu.memory_space<vmem>>, %arg9: memref<32x32xf32, #tpu.memory_space<vmem>>) attributes {dimension_semantics = [#tpu.dimension_semantics<parallel>, #tpu.dimension_semantics<parallel>, #tpu.dimension_semantics<arbitrary>], iteration_bounds = array<i64: 1, 1, 1>, scalar_prefetch = 0 : i64, scratch_operands = 1 : i64, tpu.core_type = #tpu.core_type<tc>, window_params = [{transform_indices = @transform_0, window_bounds = array<i64: 32, 64>}, {transform_indices = @transform_1, window_bounds = array<i64: 64, 32>}, {transform_indices = @transform_2, window_bounds = array<i64: 1, 32>}, {transform_indices = @transform_3, window_bounds = array<i64: 1, 32>}, {transform_indices = @transform_4, window_bounds = array<i64: 1, 32>}, {transform_indices = @transform_5, window_bounds = array<i64: 32, 32>}]} {
    %c0_i32 = arith.constant 0 : i32
    %0 = arith.cmpi eq, %arg2, %c0_i32 : i32
    %1 = arith.extui %0 : i1 to i32
    %c0_i32_0 = arith.constant 0 : i32
    %2 = arith.cmpi ne, %1, %c0_i32_0 : i32
    scf.if %2 {
      %cst_10 = arith.constant 0.000000e+00 : f32
      %12 = vector.broadcast %cst_10 : f32 to vector<32x32xf32>
      %c0_11 = arith.constant 0 : index
      %c0_12 = arith.constant 0 : index
      %13 = vector.load %arg9[%c0_11, %c0_12] : memref<32x32xf32, #tpu.memory_space<vmem>>, vector<32x32xf32>
      tpu.vector_store %arg9[%c0_11, %c0_12], %12 {strides = array<i32>} : memref<32x32xf32, #tpu.memory_space<vmem>>, vector<32x32xf32>,
    } else {
    }
    %c0 = arith.constant 0 : index
    %c0_1 = arith.constant 0 : index
    %3 = vector.load %arg9[%c0, %c0_1] : memref<32x32xf32, #tpu.memory_space<vmem>>, vector<32x32xf32>
    %c0_2 = arith.constant 0 : index
    %c0_3 = arith.constant 0 : index
    %4 = vector.load %arg3[%c0_2, %c0_3] : memref<32x64xbf16, #tpu.memory_space<vmem>>, vector<32x64xbf16>
    %c0_4 = arith.constant 0 : index
    %c0_5 = arith.constant 0 : index
    %5 = vector.load %arg4[%c0_4, %c0_5] : memref<64x32xbf16, #tpu.memory_space<vmem>>, vector<64x32xbf16>
    %cst = arith.constant dense<0.000000e+00> : vector<32x32xf32>
    %6 = tpu.matmul %4, %5, %cst {dimension_numbers = #tpu.dot_dimension_numbers<[1], [0], [0], [1], [0, 0, 1, 1], [], []>} : vector<32x64xbf16>, vector<64x32xbf16>, vector<32x32xf32> -> vector<32x32xf32>
    %7 = arith.addf %3, %6 : vector<32x32xf32>
    %c0_6 = arith.constant 0 : index
    %c0_7 = arith.constant 0 : index
    %8 = vector.load %arg9[%c0_6, %c0_7] : memref<32x32xf32, #tpu.memory_space<vmem>>, vector<32x32xf32>
    tpu.vector_store %arg9[%c0_6, %c0_7], %7 {strides = array<i32>} : memref<32x32xf32, #tpu.memory_space<vmem>>, vector<32x32xf32>,
    %c0_i32_8 = arith.constant 0 : i32
    %9 = arith.cmpi eq, %arg2, %c0_i32_8 : i32
    %10 = arith.extui %9 : i1 to i32
    %c0_i32_9 = arith.constant 0 : i32
    %11 = arith.cmpi ne, %10, %c0_i32_9 : i32
    scf.if %11 {
      %c0_10 = arith.constant 0 : index
      %c0_11 = arith.constant 0 : index
      %12 = vector.load %arg9[%c0_10, %c0_11] : memref<32x32xf32, #tpu.memory_space<vmem>>, vector<32x32xf32>
      %c0_12 = arith.constant 0 : index
      %c0_13 = arith.constant 0 : index
      %13 = vector.load %arg5[%c0_12, %c0_13] : memref<1x32xbf16, #tpu.memory_space<vmem>>, vector<1x32xbf16>
      %14 = arith.extf %13 : vector<1x32xbf16> to vector<1x32xf32>
      %15 = vector.broadcast %14 : vector<1x32xf32> to vector<32x32xf32>
      %16 = arith.addf %12, %15 : vector<32x32xf32>
      %cst_14 = arith.constant dense<0.000000e+00> : vector<32xf32>
      %17 = vector.multi_reduction <add>, %16, %cst_14 [1] : vector<32x32xf32> to vector<32xf32>
      %18 = vector.shape_cast %17 : vector<32xf32> to vector<32x1xf32>
      %cst_15 = arith.constant 3.200000e+01 : f32
      %19 = vector.broadcast %cst_15 : f32 to vector<32x1xf32>
      %20 = arith.divf %18, %19 : vector<32x1xf32>
      %21 = vector.broadcast %20 : vector<32x1xf32> to vector<32x32xf32>
      %22 = arith.subf %16, %21 : vector<32x32xf32>
      %23 = arith.mulf %22, %22 : vector<32x32xf32>
      %cst_16 = arith.constant dense<0.000000e+00> : vector<32xf32>
      %24 = vector.multi_reduction <add>, %23, %cst_16 [1] : vector<32x32xf32> to vector<32xf32>
      %25 = vector.shape_cast %24 : vector<32xf32> to vector<32x1xf32>
      %cst_17 = arith.constant 3.200000e+01 : f32
      %26 = vector.broadcast %cst_17 : f32 to vector<32x1xf32>
      %27 = arith.divf %25, %26 : vector<32x1xf32>
      %28 = vector.broadcast %20 : vector<32x1xf32> to vector<32x32xf32>
      %29 = arith.subf %16, %28 : vector<32x32xf32>
      %cst_18 = arith.constant 9.99999974E-6 : f32
      %30 = vector.broadcast %cst_18 : f32 to vector<32x1xf32>
      %31 = arith.addf %27, %30 : vector<32x1xf32>
      %32 = math.rsqrt %31 : vector<32x1xf32>
      %33 = vector.broadcast %32 : vector<32x1xf32> to vector<32x32xf32>
      %34 = arith.mulf %29, %33 : vector<32x32xf32>
      %c0_19 = arith.constant 0 : index
      %c0_20 = arith.constant 0 : index
      %35 = vector.load %arg6[%c0_19, %c0_20] : memref<1x32xbf16, #tpu.memory_space<vmem>>, vector<1x32xbf16>
      %36 = arith.extf %35 : vector<1x32xbf16> to vector<1x32xf32>
      %37 = vector.broadcast %36 : vector<1x32xf32> to vector<32x32xf32>
      %38 = arith.mulf %34, %37 : vector<32x32xf32>
      %c0_21 = arith.constant 0 : index
      %c0_22 = arith.constant 0 : index
      %39 = vector.load %arg7[%c0_21, %c0_22] : memref<1x32xbf16, #tpu.memory_space<vmem>>, vector<1x32xbf16>
      %40 = arith.extf %39 : vector<1x32xbf16> to vector<1x32xf32>
      %41 = vector.broadcast %40 : vector<1x32xf32> to vector<32x32xf32>
      %42 = arith.addf %38, %41 : vector<32x32xf32>
      %43 = arith.truncf %42 : vector<32x32xf32> to vector<32x32xbf16>
      %c0_23 = arith.constant 0 : index
      %c0_24 = arith.constant 0 : index
      %44 = vector.load %arg8[%c0_23, %c0_24] : memref<32x32xbf16, #tpu.memory_space<vmem>>, vector<32x32xbf16>
      tpu.vector_store %arg8[%c0_23, %c0_24], %43 {strides = array<i32>} : memref<32x32xbf16, #tpu.memory_space<vmem>>, vector<32x32xbf16>,
    } else {
    }
    return
  }
  func.func @transform_0(%arg0: i32, %arg1: i32, %arg2: i32) -> (i32, i32) {
    %c0_i32 = arith.constant 0 : i32
    return %arg0, %arg2 : i32, i32
  }
  func.func @transform_1(%arg0: i32, %arg1: i32, %arg2: i32) -> (i32, i32) {
    %c0_i32 = arith.constant 0 : i32
    return %arg2, %arg1 : i32, i32
  }
  func.func @transform_2(%arg0: i32, %arg1: i32, %arg2: i32) -> (i32, i32) {
    %c0_i32 = arith.constant 0 : i32
    %c0_i32_0 = arith.constant 0 : i32
    return %c0_i32, %arg1 : i32, i32
  }
  func.func @transform_3(%arg0: i32, %arg1: i32, %arg2: i32) -> (i32, i32) {
    %c0_i32 = arith.constant 0 : i32
    %c0_i32_0 = arith.constant 0 : i32
    return %c0_i32, %arg1 : i32, i32
  }
  func.func @transform_4(%arg0: i32, %arg1: i32, %arg2: i32) -> (i32, i32) {
    %c0_i32 = arith.constant 0 : i32
    %c0_i32_0 = arith.constant 0 : i32
    return %c0_i32, %arg1 : i32, i32
  }
  func.func @transform_5(%arg0: i32, %arg1: i32, %arg2: i32) -> (i32, i32) {
    %c0_i32 = arith.constant 0 : i32
    return %arg0, %arg1 : i32, i32
  }
}

</mosaic_0001>

<llo_original>
// kernel: tpu_custom_call.1
$region0: #{tpu_custom_call.1}
  #allocation0 [shape = 'u32[]', space=smem, size = 0x4, offset = 0x4, fixed_abs, tag = 'smem constant byte address 0x4 - core index']
  #allocation1 [shape = 'u32[144,128]{1,0:T(1,128)}', space=vmem, size = 0x12000, scoped, tag = 'internal scratch']
  #allocation2 [shape = 'f32[32,32]{1,0:T(8,128)}', space=vmem, size = 0x4000, scoped, tag = 'scratch operand']
  %s0 = inlined_call_operand.vmem [shape: bf16[32,64], index: 0, kind: input, shape index: {}]
  %s1 = inlined_call_operand.vmem [shape: bf16[64,32], index: 1, kind: input, shape index: {}]
  %s2 = inlined_call_operand.vmem [shape: bf16[1,32], index: 2, kind: input, shape index: {}]
  %s3 = inlined_call_operand.vmem [shape: bf16[1,32], index: 3, kind: input, shape index: {}]
  %s4 = inlined_call_operand.vmem [shape: bf16[1,32], index: 4, kind: input, shape index: {}]
  %s5 = inlined_call_operand.hbm [shape: bf16[32,32], index: 5, kind: output, shape index: {}]
  %s6 = sld [smem:[#allocation0]]
  $region38: #{tpu_custom_call.1} parent=0
    _
  %s8 = ssub.s32 1, %s6
  %s9 = scalar_select 0, %s8, %s6
  $region1: #{tpu_custom_call.1} parent=0
    #allocation3 [shape = 'u8[8192]{0}', space=vmem, size = 0x2000, scoped, tag = 'output window, operand 0, single buffered']
    #allocation4 [shape = 's32[1]{0}', space=sflag, size = 0x4, scoped, tag = 'scoped memory for tpu_custom_call.1']
    %10 = vsyncpa [#allocation4], 0
    // Predicated region
    $region2: #{tpu_custom_call.1} parent=1 // pred_check
      _
    $region3: #{tpu_custom_call.1} parent=1 // pred_check_branch
      %12 = sbr.rel (0) target = $region5
    $region4: #{tpu_custom_call.1} parent=1 // pred_region
      _
    $region5: #{tpu_custom_call.1} parent=1 // pred_fallthru
      _
    // Predicated region
    $region6: #{tpu_custom_call.1} parent=1 // pred_check
      _
    $region7: #{tpu_custom_call.1} parent=1 // pred_check_branch
      %14 = sbr.rel (0) target = $region9
    $region8: #{tpu_custom_call.1} parent=1 // pred_region
      _
    $region9: #{tpu_custom_call.1} parent=1 // pred_fallthru
      _
    // Predicated region
    $region10: #{tpu_custom_call.1} parent=1 // pred_check
      _
    $region11: #{tpu_custom_call.1} parent=1 // pred_check_branch
      %16 = sbr.rel (0) target = $region13
    $region12: #{tpu_custom_call.1} parent=1 // pred_region
      _
    $region13: #{tpu_custom_call.1} parent=1 // pred_fallthru
      _
    // Predicated region
    $region14: #{tpu_custom_call.1} parent=1 // pred_check
      _
    $region15: #{tpu_custom_call.1} parent=1 // pred_check_branch
      %18 = sbr.rel (0) target = $region17
    $region16: #{tpu_custom_call.1} parent=1 // pred_region
      _
    $region17: #{tpu_custom_call.1} parent=1 // pred_fallthru
      _
    // Predicated region
    $region18: #{tpu_custom_call.1} parent=1 // pred_check
      _
    $region19: #{tpu_custom_call.1} parent=1 // pred_check_branch
      %20 = sbr.rel (0) target = $region21
    $region20: #{tpu_custom_call.1} parent=1 // pred_region
      _
    $region21: #{tpu_custom_call.1} parent=1 // pred_fallthru
      _
    %p22 = scmp.eq.s32.totalorder 0, 0
    // Predicated region
    $region22: #{tpu_custom_call.1} parent=1 // pred_check
      %p23 = pneg %p22
    $region23: #{tpu_custom_call.1} parent=1 // pred_check_branch
      %25 = sbr.rel (%p23) target = $region25
    $region24: #{tpu_custom_call.1} parent=1 // pred_region
      %vm26 = vcmask 261120
      %27 = vst.msk [vmem:[#allocation2] sm:$0xff] %vm26, 0.0
      %28 = vst.msk [vmem:[#allocation2 + $0x8] sm:$0xff] %vm26, 0.0
      %29 = vst.msk [vmem:[#allocation2 + $0x10] sm:$0xff] %vm26, 0.0
      %30 = vst.msk [vmem:[#allocation2 + $0x18] sm:$0xff] %vm26, 0.0
    $region25: #{tpu_custom_call.1} parent=1 // pred_fallthru
      _
    %v31 = vld [vmem:[#allocation2] sm:$0xff]
    %v32 = vld [vmem:[#allocation2 + $0x8] sm:$0xff]
    %v33 = vld [vmem:[#allocation2 + $0x10] sm:$0xff]
    %v34 = vld [vmem:[#allocation2 + $0x18] sm:$0xff]
    %v35 = vld [vmem:[%s0] sm:$0xf]
    %v36 = vld [vmem:[%s0 + $0x4] sm:$0xf]
    %v37 = vld [vmem:[%s0 + $0x8] sm:$0xf]
    %v38 = vld [vmem:[%s0 + $0xc] sm:$0xf]
    %v39 = vld [vmem:[%s1] sm:$0xf]
    %v40 = vld [vmem:[%s1 + $0x4] sm:$0xf]
    %v41 = vld [vmem:[%s1 + $0x8] sm:$0xf]
    %v42 = vld [vmem:[%s1 + $0xc] sm:$0xf]
    %v43 = vld [vmem:[%s1 + $0x10] sm:$0xf]
    %v44 = vld [vmem:[%s1 + $0x14] sm:$0xf]
    %v45 = vld [vmem:[%s1 + $0x18] sm:$0xf]
    %v46 = vld [vmem:[%s1 + $0x1c] sm:$0xf]
    %v51 = vunpack.c.l.b16 %v35
    %v52 = vunpack.c.l.b16 %v36
    %v53 = vunpack.c.l.b16 %v37
    %v54 = vunpack.c.l.b16 %v38
    %v55 = vpack.c.b16 %v52, %v51
    %v56 = vpack.c.b16 %v54, %v53
    %v65 = vunpack.c.l.b16 %v39
    %v66 = vunpack.c.l.b16 %v40
    %v67 = vunpack.c.l.b16 %v41
    %v68 = vunpack.c.l.b16 %v42
    %v69 = vunpack.c.l.b16 %v43
    %v70 = vunpack.c.l.b16 %v44
    %v71 = vunpack.c.l.b16 %v45
    %v72 = vunpack.c.l.b16 %v46
    %v73 = vpack.c.b16 %v66, %v65
    %v74 = vpack.c.b16 %v68, %v67
    %v75 = vpack.c.b16 %v70, %v69
    %v76 = vpack.c.b16 %v72, %v71
    %vm81 = vcmask 523264
    %v83 = vsel %vm81, %v55, 0
    %v86 = vsel %vm81, %v56, 0
    %88 = vmatprep.subr.bf16.mxu0 0
    %89 = vmatpush1.bf16.msra.mxu0 %v73
    %90 = vmatprep.subr.bf16.mxu0 0
    %91 = vmatpush1.bf16.msra.mxu0 %v74
    %92 = vmatprep.subr.bf16.mxu0 0
    %93 = vmatpush1.bf16.msra.mxu0 %v75
    %94 = vmatprep.subr.bf16.mxu0 0
    %95 = vmatpush1.bf16.msra.mxu0 %v76
    %96 = vmatprep.subr.bf16.mxu0 0
    %97 = vmatpush1.bf16.msra.mxu0 0
    %98 = vmatprep.subr.bf16.mxu0 0
    %99 = vmatpush1.bf16.msra.mxu0 0
    %100 = vmatprep.subr.bf16.mxu0 0
    %101 = vmatpush1.bf16.msra.mxu0 0
    %102 = vmatprep.subr.bf16.mxu0 0
    %103 = vmatpush1.bf16.msra.mxu0 0
    %104 = vmatprep.subr.bf16.mxu0 0
    %105 = vmatpush1.bf16.msra.mxu0 0
    %106 = vmatprep.subr.bf16.mxu0 0
    %107 = vmatpush1.bf16.msra.mxu0 0
    %108 = vmatprep.subr.bf16.mxu0 0
    %109 = vmatpush1.bf16.msra.mxu0 0
    %110 = vmatprep.subr.bf16.mxu0 0
    %111 = vmatpush1.bf16.msra.mxu0 0
    %112 = vmatprep.subr.bf16.mxu0 0
    %113 = vmatpush1.bf16.msra.mxu0 0
    %114 = vmatprep.subr.bf16.mxu0 0
    %115 = vmatpush1.bf16.msra.mxu0 0
    %116 = vmatprep.subr.bf16.mxu0 0
    %117 = vmatpush1.bf16.msra.mxu0 0
    %118 = vmatprep.subr.bf16.mxu0 0
    %119 = vmatpush1.bf16.msra.mxu0 0
    %120 = vmatprep.mubr.bf16.mxu0 0
    %121 = vmatmul.mubr.bf16.gmra.mrb[0].mxu0 %v83
    %v122 = vpop.f32.mrb[0].mxu0
    %v123 = vadd.f32 0.0, %v122
    %v124 = vpop.f32.mrb[0].mxu0
    %v125 = vpop.f32.mrb[0].mxu0
    %v126 = vadd.f32 0.0, %v125
    %v127 = vpop.f32.mrb[0].mxu0
    %128 = vmatprep.mubr.bf16.mxu0 0
    %129 = vmatmul.mubr.bf16.gmra.mrb[0].mxu0 %v86
    %v130 = vpop.f32.mrb[0].mxu0
    %v131 = vadd.f32 0.0, %v130
    %v132 = vpop.f32.mrb[0].mxu0
    %v133 = vpop.f32.mrb[0].mxu0
    %v134 = vadd.f32 0.0, %v133
    %v135 = vpop.f32.mrb[0].mxu0
    %136 = vdwg.mxu0
    %v137 = vadd.f32 %v31, %v123
    %v138 = vadd.f32 %v32, %v126
    %v139 = vadd.f32 %v33, %v131
    %v140 = vadd.f32 %v34, %v134
    %vm141 = vcmask 261120
    %142 = vst.msk [vmem:[#allocation2] sm:$0xff] %vm141, %v137
    %143 = vst.msk [vmem:[#allocation2 + $0x8] sm:$0xff] %vm141, %v138
    %144 = vst.msk [vmem:[#allocation2 + $0x10] sm:$0xff] %vm141, %v139
    %145 = vst.msk [vmem:[#allocation2 + $0x18] sm:$0xff] %vm141, %v140
    // Predicated region
    $region26: #{tpu_custom_call.1} parent=1 // pred_check
      %p146 = pneg %p22
    $region27: #{tpu_custom_call.1} parent=1 // pred_check_branch
      %148 = sbr.rel (%p146) target = $region29
    $region28: #{tpu_custom_call.1} parent=1 // pred_region
      %v149 = vld [vmem:[#allocation2] sm:$0xff]
      %v150 = vld [vmem:[#allocation2 + $0x8] sm:$0xff]
      %v151 = vld [vmem:[#allocation2 + $0x10] sm:$0xff]
      %v152 = vld [vmem:[#allocation2 + $0x18] sm:$0xff]
      %v153 = vld [vmem:[%s2] sm:$0x1]
      %v154 = vunpack.c.l.bf16 %v153
      %v155 = vlaneseq
      %v156 = vshrl.u32 %v155, 7
      %v157 = vsub.s32 0, %v156
      %v158 = vrot.slane %v154, %v157
      %v159 = vadd.f32 %v149, %v158
      %v160 = vadd.f32 %v150, %v158
      %v161 = vadd.f32 %v151, %v158
      %v162 = vadd.f32 %v152, %v158
      %v163 = vsel %vm141, %v159, 0.0
      %164 = vadd.xlane.f32.xlu0 %v163
      %v165 = vpop.xlane.xlu0 %164
      %v166 = vsel %vm141, %v160, 0.0
      %167 = vadd.xlane.f32.xlu0 %v166
      %v168 = vpop.xlane.xlu0 %167
      %v169 = vsel %vm141, %v161, 0.0
      %170 = vadd.xlane.f32.xlu0 %v169
      %v171 = vpop.xlane.xlu0 %170
      %v172 = vsel %vm141, %v162, 0.0
      %173 = vadd.xlane.f32.xlu0 %v172
      %v174 = vpop.xlane.xlu0 %173
      %v175 = vrcp.pop 32.0
      %v176 = vmul.f32 %v165, %v175
      %v177 = vmul.f32 %v168, %v175
      %v178 = vmul.f32 %v171, %v175
      %v179 = vmul.f32 %v174, %v175
      %v180 = vsub.f32 %v159, %v176
      %v181 = vsub.f32 %v160, %v177
      %v182 = vsub.f32 %v161, %v178
      %v183 = vsub.f32 %v162, %v179
      %v184 = vmul.f32 %v180, %v180
      %v185 = vmul.f32 %v181, %v181
      %v186 = vmul.f32 %v182, %v182
      %v187 = vmul.f32 %v183, %v183
      %v188 = vsel %vm141, %v184, 0.0
      %189 = vadd.xlane.f32.xlu0 %v188
      %v190 = vpop.xlane.xlu0 %189
      %v191 = vsel %vm141, %v185, 0.0
      %192 = vadd.xlane.f32.xlu0 %v191
      %v193 = vpop.xlane.xlu0 %192
      %v194 = vsel %vm141, %v186, 0.0
      %195 = vadd.xlane.f32.xlu0 %v194
      %v196 = vpop.xlane.xlu0 %195
      %v197 = vsel %vm141, %v187, 0.0
      %198 = vadd.xlane.f32.xlu0 %v197
      %v199 = vpop.xlane.xlu0 %198
      %v200 = vmul.f32 %v190, %v175
      %v201 = vmul.f32 %v193, %v175
      %v202 = vmul.f32 %v196, %v175
      %v203 = vmul.f32 %v199, %v175
      %v204 = vadd.f32 %v200, 1e-05
      %v205 = vadd.f32 %v201, 1e-05
      %v206 = vadd.f32 %v202, 1e-05
      %v207 = vadd.f32 %v203, 1e-05
      %v208 = vrsqrt.pop %v204
      %v209 = vrsqrt.pop %v205
      %v210 = vrsqrt.pop %v206
      %v211 = vrsqrt.pop %v207
      %v212 = vmul.f32 %v180, %v208
      %v213 = vmul.f32 %v181, %v209
      %v214 = vmul.f32 %v182, %v210
      %v215 = vmul.f32 %v183, %v211
      %v216 = vld [vmem:[%s3] sm:$0x1]
      %v217 = vunpack.c.l.bf16 %v216
      %v218 = vlaneseq
      %v219 = vshrl.u32 %v218, 7
      %v220 = vsub.s32 0, %v219
      %v221 = vrot.slane %v217, %v220
      %v222 = vmul.f32 %v212, %v221
      %v223 = vmul.f32 %v213, %v221
      %v224 = vmul.f32 %v214, %v221
      %v225 = vmul.f32 %v215, %v221
      %v226 = vld [vmem:[%s4] sm:$0x1]
      %v227 = vunpack.c.l.bf16 %v226
      %v228 = vlaneseq
      %v229 = vshrl.u32 %v228, 7
      %v230 = vsub.s32 0, %v229
      %v231 = vrot.slane %v227, %v230
      %v232 = vadd.f32 %v222, %v231
      %v233 = vadd.f32 %v223, %v231
      %v234 = vadd.f32 %v224, %v231
      %v235 = vadd.f32 %v225, %v231
      %v236 = vpack.c.bf16 %v233, %v232
      %v237 = vpack.c.bf16 %v235, %v234
      %v240 = vunpack.c.l.b16 %v236
      %v241 = vunpack.c.h.b16 %v236
      %v242 = vunpack.c.l.b16 %v237
      %v243 = vunpack.c.h.b16 %v237
      %v244 = vpack.c.b16 %v240, %v240
      %v245 = vpack.c.b16 %v241, %v241
      %v246 = vpack.c.b16 %v242, %v242
      %v247 = vpack.c.b16 %v243, %v243
      %vm252 = vcmask 257024
      %253 = vst.msk [vmem:[#allocation3] sm:$0xf] %vm252, %v244
      %254 = vst.msk [vmem:[#allocation3 + $0x4] sm:$0xf] %vm252, %v245
      %255 = vst.msk [vmem:[#allocation3 + $0x8] sm:$0xf] %vm252, %v246
      %256 = vst.msk [vmem:[#allocation3 + $0xc] sm:$0xf] %vm252, %v247
    $region29: #{tpu_custom_call.1} parent=1 // pred_fallthru
      _
    // Predicated region
    $region30: #{tpu_custom_call.1} parent=1 // pred_check
      _
    $region31: #{tpu_custom_call.1} parent=1 // pred_check_branch
      %258 = sbr.rel (0) target = $region33
    $region32: #{tpu_custom_call.1} parent=1 // pred_region
      %s260 = ssub.s32 256, 256
      %261 = vsyncadd [#allocation4], %s260
      %s262 = sshll.u32 [#allocation3], 4
      %s263 = int_to_ptr.vmem [resolvable:$true] %s262
      %268 = dma.vmem_to_hbm [thread:$0]  %s263, 256, %s5, [#allocation4], 64, 64, 4
    $region33: #{tpu_custom_call.1} parent=1 // pred_fallthru
      _
    // Predicated region
    $region34: #{tpu_custom_call.1} parent=1 // pred_check
      _
    $region35: #{tpu_custom_call.1} parent=1 // pred_check_branch
      %270 = sbr.rel (0) target = $region37
    $region36: #{tpu_custom_call.1} parent=1 // pred_region
      %271 = dma.done [#allocation4], 256
    $region37: #{tpu_custom_call.1} parent=1 // pred_fallthru
      _
    %272 = vsyncpa [#allocation4], 1

</llo_original>
